<compile_context>
chip_gen: v7x
topology: tpu7x:2x2x1
jax: 0.10.0
libtpu: 0.0.40
codegen_flags: <defaults>
</compile_context>

<pallas_src>
import jax
import jax.numpy as jnp
from jax import lax
from jax.experimental import pallas as pl
from jax.experimental.pallas import tpu as pltpu

# ---- "opt" configuration (deterministic, synthetic) -------------------------
LABEL_NC = 8                 # opt.label_nc
CONTAIN_DONTCARE = False     # opt.contain_dontcare_label
NO_INSTANCE = False          # opt.no_instance
SEM_NC = LABEL_NC + (1 if CONTAIN_DONTCARE else 0)
TOTAL_NC = SEM_NC + (0 if NO_INSTANCE else 1)   # semantics + instance edge map
OUT_NC = 3                   # generated RGB image channels


# -----------------------------------------------------------------------------
# Fused kernel: preprocess_input (one-hot + get_edges) + synthetic netG,
# one batch element per grid step.
# -----------------------------------------------------------------------------
def fused_kernel(w_ref, b_ref, label_ref, inst_ref, sem_ref, fake_ref):
    # w_ref: SMEM (OUT_NC, TOTAL_NC) f32 ; b_ref: SMEM (OUT_NC,) f32
    # label_ref, inst_ref: (1, 1, H, W) int32 VMEM blocks
    # sem_ref: (1, TOTAL_NC, H, W) f32 ; fake_ref: (1, OUT_NC, H, W) f32
    label = label_ref[0, 0]                              # (H, W) int32
    H, W = label.shape

    # ---- input_label.scatter_(1, label_map, 1.0): vectorized one-hot --------
    # Out-of-range labels produce an all-zero channel column (PyTorch scatter_
    # with OOB indices would be UB; this is the benign interpretation).
    chan = lax.broadcasted_iota(jnp.int32, (SEM_NC, H, W), 0)
    onehot = (label[None, :, :] == chan).astype(jnp.float32)   # (SEM_NC, H, W)
    sem_ref[0, :SEM_NC] = onehot

    # ---- get_edges(instance) ------------------------------------------------
    edge = None
    if not NO_INSTANCE:  # static guard: never write channel SEM_NC when absent
        t = inst_ref[0, 0]                                      # (H, W) int32
        dw = (t[:, 1:] != t[:, :-1]).astype(jnp.float32)        # (H, W-1)
        dh = (t[1:, :] != t[:-1, :]).astype(jnp.float32)        # (H-1, W)
        zc = jnp.zeros((H, 1), jnp.float32)
        zr = jnp.zeros((1, W), jnp.float32)
        esum = (jnp.concatenate([zc, dw], axis=1)    # edge[:, 1:]  |= dw
                + jnp.concatenate([dw, zc], axis=1)  # edge[:, :-1] |= dw
                + jnp.concatenate([zr, dh], axis=0)  # edge[1:, :]  |= dh
                + jnp.concatenate([dh, zr], axis=0)) # edge[:-1, :] |= dh
        edge = (esum > 0.0).astype(jnp.float32)
        sem_ref[0, SEM_NC] = edge

    # ---- synthetic netG: per-pixel 1x1 conv + tanh (pure VPU, no MXU) -------
    for o in range(OUT_NC):
        acc = onehot[0] * w_ref[o, 0]
        for c in range(1, SEM_NC):
            acc = acc + onehot[c] * w_ref[o, c]
        if not NO_INSTANCE:
            acc = acc + edge * w_ref[o, SEM_NC]
        fake_ref[0, o] = jnp.tanh(acc + b_ref[o])


# -----------------------------------------------------------------------------
# Wrapper: Pix2PixModel.forward(data, mode='inference')
# -----------------------------------------------------------------------------
def pix2pix_inference(label, instance, gen_w, gen_b):
    B, _, H, W = label.shape

    sem, fake = pl.pallas_call(
        fused_kernel,
        out_shape=(jax.ShapeDtypeStruct((B, TOTAL_NC, H, W), jnp.float32),
                   jax.ShapeDtypeStruct((B, OUT_NC, H, W), jnp.float32)),
        grid=(B,),
        in_specs=[
            pl.BlockSpec(memory_space=pltpu.MemorySpace.SMEM),       # gen_w
            pl.BlockSpec(memory_space=pltpu.MemorySpace.SMEM),       # gen_b
            pl.BlockSpec((1, 1, H, W), lambda b: (b, 0, 0, 0)),      # label
            pl.BlockSpec((1, 1, H, W), lambda b: (b, 0, 0, 0)),      # instance
        ],
        out_specs=(
            pl.BlockSpec((1, TOTAL_NC, H, W), lambda b: (b, 0, 0, 0)),
            pl.BlockSpec((1, OUT_NC, H, W), lambda b: (b, 0, 0, 0)),
        ),
        compiler_params=pltpu.CompilerParams(
            dimension_semantics=("parallel",)),
    )(gen_w, gen_b, label, instance)

    return fake, sem


# -----------------------------------------------------------------------------
# Pure-JAX reference (semantics check)
# -----------------------------------------------------------------------------
def reference_forward(label, instance, gen_w, gen_b):
    onehot = jax.nn.one_hot(label[:, 0], SEM_NC, axis=1, dtype=jnp.float32)
    t = instance[:, 0]
    e = jnp.zeros(t.shape, dtype=bool)
    dw = t[:, :, 1:] != t[:, :, :-1]
    e = e.at[:, :, 1:].set(e[:, :, 1:] | dw)
    e = e.at[:, :, :-1].set(e[:, :, :-1] | dw)
    dh = t[:, 1:, :] != t[:, :-1, :]
    e = e.at[:, 1:, :].set(e[:, 1:, :] | dh)
    e = e.at[:, :-1, :].set(e[:, :-1, :] | dh)
    sem = jnp.concatenate([onehot, e[:, None].astype(jnp.float32)], axis=1)
    img = jnp.tanh(jnp.einsum('oc,bchw->bohw', gen_w, sem)
                   + gen_b.reshape(1, OUT_NC, 1, 1))
    return img, sem


if __name__ == "__main__":
    B, H, W = 2, 16, 16
    key = jax.random.PRNGKey(0)
    k1, k2, k3, k4 = jax.random.split(key, 4)

    # data dict inputs: 'label' (B,1,H,W) long, 'instance' (B,1,H,W)
    label = jax.random.randint(k1, (B, 1, H, W), 0, LABEL_NC, dtype=jnp.int32)
    instance = jax.random.randint(k2, (B, 1, H, W), 0, 4, dtype=jnp.int32)

    # deterministic synthetic generator parameters
    gen_w = jax.random.normal(k3, (OUT_NC, TOTAL_NC), jnp.float32) * 0.2
    gen_b = jax.random.normal(k4, (OUT_NC,), jnp.float32) * 0.1

    fake, sem = pix2pix_inference(label, instance, gen_w, gen_b)
    jax.block_until_ready(fake)

    ref_fake, ref_sem = reference_forward(label, instance, gen_w, gen_b)
    assert jnp.allclose(sem, ref_sem, atol=1e-6), "semantics mismatch"
    assert jnp.allclose(fake, ref_fake, atol=1e-5), "fake image mismatch"

    print("KERNEL_OK")
</pallas_src>

<mosaic_0001>
module attributes {stable_mosaic.version = 11 : i64} {
  func.func @fused_kernel(%arg0: i32, %arg1: memref<3x9xf32, #tpu.memory_space<smem>>, %arg2: memref<3xf32, #tpu.memory_space<smem>>, %arg3: memref<1x1x16x16xi32, #tpu.memory_space<vmem>>, %arg4: memref<1x1x16x16xi32, #tpu.memory_space<vmem>>, %arg5: memref<1x9x16x16xf32, #tpu.memory_space<vmem>>, %arg6: memref<1x3x16x16xf32, #tpu.memory_space<vmem>>) attributes {dimension_semantics = [#tpu.dimension_semantics<parallel>], iteration_bounds = array<i64: 2>, scalar_prefetch = 0 : i64, scratch_operands = 0 : i64, tpu.core_type = #tpu.core_type<tc>, window_params = [{transform_indices = @transform_0, window_bounds = array<i64: 3, 9>}, {transform_indices = @transform_1, window_bounds = array<i64: 3>}, {transform_indices = @transform_2, window_bounds = array<i64: 1, 1, 16, 16>}, {transform_indices = @transform_3, window_bounds = array<i64: 1, 1, 16, 16>}, {transform_indices = @transform_4, window_bounds = array<i64: 1, 9, 16, 16>}, {transform_indices = @transform_5, window_bounds = array<i64: 1, 3, 16, 16>}]} {
    %c0 = arith.constant 0 : index
    %c0_0 = arith.constant 0 : index
    %c0_1 = arith.constant 0 : index
    %c0_2 = arith.constant 0 : index
    %0 = vector.load %arg3[%c0, %c0_0, %c0_1, %c0_2] : memref<1x1x16x16xi32, #tpu.memory_space<vmem>>, vector<1x1x16x16xi32>
    %1 = vector.shape_cast %0 : vector<1x1x16x16xi32> to vector<16x16xi32>
    %2 = tpu.iota {dimensions = array<i32: 0>} : vector<8x16x16xi32>
    %3 = vector.shape_cast %1 : vector<16x16xi32> to vector<1x16x16xi32>
    %4 = vector.broadcast %3 : vector<1x16x16xi32> to vector<8x16x16xi32>
    %5 = arith.cmpi eq, %4, %2 : vector<8x16x16xi32>
    %6 = arith.extui %5 : vector<8x16x16xi1> to vector<8x16x16xi32>
    %7 = arith.sitofp %6 : vector<8x16x16xi32> to vector<8x16x16xf32>
    %c0_3 = arith.constant 0 : index
    %c0_4 = arith.constant 0 : index
    %c0_5 = arith.constant 0 : index
    %c0_6 = arith.constant 0 : index
    %8 = vector.load %arg5[%c0_3, %c0_4, %c0_5, %c0_6] : memref<1x9x16x16xf32, #tpu.memory_space<vmem>>, vector<1x8x16x16xf32>
    %9 = vector.shape_cast %8 : vector<1x8x16x16xf32> to vector<8x16x16xf32>
    %10 = vector.shape_cast %7 : vector<8x16x16xf32> to vector<1x8x16x16xf32>
    tpu.vector_store %arg5[%c0_3, %c0_4, %c0_5, %c0_6], %10 {strides = array<i32>} : memref<1x9x16x16xf32, #tpu.memory_space<vmem>>, vector<1x8x16x16xf32>,
    %c0_7 = arith.constant 0 : index
    %c0_8 = arith.constant 0 : index
    %c0_9 = arith.constant 0 : index
    %c0_10 = arith.constant 0 : index
    %11 = vector.load %arg4[%c0_7, %c0_8, %c0_9, %c0_10] : memref<1x1x16x16xi32, #tpu.memory_space<vmem>>, vector<1x1x16x16xi32>
    %12 = vector.shape_cast %11 : vector<1x1x16x16xi32> to vector<16x16xi32>
    %13 = vector.extract_strided_slice %12 {offsets = [0, 1], sizes = [16, 15], strides = [1, 1]} : vector<16x16xi32> to vector<16x15xi32>
    %14 = vector.extract_strided_slice %12 {offsets = [0, 0], sizes = [16, 15], strides = [1, 1]} : vector<16x16xi32> to vector<16x15xi32>
    %15 = arith.cmpi ne, %13, %14 : vector<16x15xi32>
    %16 = arith.extui %15 : vector<16x15xi1> to vector<16x15xi32>
    %17 = arith.sitofp %16 : vector<16x15xi32> to vector<16x15xf32>
    %18 = vector.extract_strided_slice %12 {offsets = [1, 0], sizes = [15, 16], strides = [1, 1]} : vector<16x16xi32> to vector<15x16xi32>
    %19 = vector.extract_strided_slice %12 {offsets = [0, 0], sizes = [15, 16], strides = [1, 1]} : vector<16x16xi32> to vector<15x16xi32>
    %20 = arith.cmpi ne, %18, %19 : vector<15x16xi32>
    %21 = arith.extui %20 : vector<15x16xi1> to vector<15x16xi32>
    %22 = arith.sitofp %21 : vector<15x16xi32> to vector<15x16xf32>
    %cst = arith.constant 0.000000e+00 : f32
    %23 = vector.broadcast %cst : f32 to vector<16x1xf32>
    %cst_11 = arith.constant 0.000000e+00 : f32
    %24 = vector.broadcast %cst_11 : f32 to vector<1x16xf32>
    %25 = tpu.concatenate %23, %17 in 1 : vector<16x1xf32>, vector<16x15xf32> -> vector<16x16xf32>
    %26 = tpu.concatenate %17, %23 in 1 : vector<16x15xf32>, vector<16x1xf32> -> vector<16x16xf32>
    %27 = arith.addf %25, %26 : vector<16x16xf32>
    %28 = tpu.concatenate %24, %22 in 0 : vector<1x16xf32>, vector<15x16xf32> -> vector<16x16xf32>
    %29 = arith.addf %27, %28 : vector<16x16xf32>
    %30 = tpu.concatenate %22, %24 in 0 : vector<15x16xf32>, vector<1x16xf32> -> vector<16x16xf32>
    %31 = arith.addf %29, %30 : vector<16x16xf32>
    %cst_12 = arith.constant 0.000000e+00 : f32
    %32 = vector.broadcast %cst_12 : f32 to vector<16x16xf32>
    %33 = arith.cmpf ogt, %31, %32 : vector<16x16xf32>
    %34 = arith.extui %33 : vector<16x16xi1> to vector<16x16xi32>
    %35 = arith.sitofp %34 : vector<16x16xi32> to vector<16x16xf32>
    %c0_13 = arith.constant 0 : index
    %c8 = arith.constant 8 : index
    %c0_14 = arith.constant 0 : index
    %c0_15 = arith.constant 0 : index
    %36 = vector.load %arg5[%c0_13, %c8, %c0_14, %c0_15] : memref<1x9x16x16xf32, #tpu.memory_space<vmem>>, vector<1x1x16x16xf32>
    %37 = vector.shape_cast %36 : vector<1x1x16x16xf32> to vector<16x16xf32>
    %38 = vector.shape_cast %35 : vector<16x16xf32> to vector<1x1x16x16xf32>
    tpu.vector_store %arg5[%c0_13, %c8, %c0_14, %c0_15], %38 {strides = array<i32>} : memref<1x9x16x16xf32, #tpu.memory_space<vmem>>, vector<1x1x16x16xf32>,
    %39 = vector.extract_strided_slice %7 {offsets = [0, 0, 0], sizes = [1, 16, 16], strides = [1, 1, 1]} : vector<8x16x16xf32> to vector<1x16x16xf32>
    %40 = vector.shape_cast %39 : vector<1x16x16xf32> to vector<16x16xf32>
    %c0_16 = arith.constant 0 : index
    %c0_17 = arith.constant 0 : index
    %41 = memref.load %arg1[%c0_16, %c0_17] : memref<3x9xf32, #tpu.memory_space<smem>>
    %42 = vector.broadcast %41 : f32 to vector<16x16xf32>
    %43 = arith.mulf %40, %42 : vector<16x16xf32>
    %44 = vector.extract_strided_slice %7 {offsets = [1, 0, 0], sizes = [1, 16, 16], strides = [1, 1, 1]} : vector<8x16x16xf32> to vector<1x16x16xf32>
    %45 = vector.shape_cast %44 : vector<1x16x16xf32> to vector<16x16xf32>
    %c0_18 = arith.constant 0 : index
    %c1 = arith.constant 1 : index
    %46 = memref.load %arg1[%c0_18, %c1] : memref<3x9xf32, #tpu.memory_space<smem>>
    %47 = vector.broadcast %46 : f32 to vector<16x16xf32>
    %48 = arith.mulf %45, %47 : vector<16x16xf32>
    %49 = arith.addf %43, %48 : vector<16x16xf32>
    %50 = vector.extract_strided_slice %7 {offsets = [2, 0, 0], sizes = [1, 16, 16], strides = [1, 1, 1]} : vector<8x16x16xf32> to vector<1x16x16xf32>
    %51 = vector.shape_cast %50 : vector<1x16x16xf32> to vector<16x16xf32>
    %c0_19 = arith.constant 0 : index
    %c2 = arith.constant 2 : index
    %52 = memref.load %arg1[%c0_19, %c2] : memref<3x9xf32, #tpu.memory_space<smem>>
    %53 = vector.broadcast %52 : f32 to vector<16x16xf32>
    %54 = arith.mulf %51, %53 : vector<16x16xf32>
    %55 = arith.addf %49, %54 : vector<16x16xf32>
    %56 = vector.extract_strided_slice %7 {offsets = [3, 0, 0], sizes = [1, 16, 16], strides = [1, 1, 1]} : vector<8x16x16xf32> to vector<1x16x16xf32>
    %57 = vector.shape_cast %56 : vector<1x16x16xf32> to vector<16x16xf32>
    %c0_20 = arith.constant 0 : index
    %c3 = arith.constant 3 : index
    %58 = memref.load %arg1[%c0_20, %c3] : memref<3x9xf32, #tpu.memory_space<smem>>
    %59 = vector.broadcast %58 : f32 to vector<16x16xf32>
    %60 = arith.mulf %57, %59 : vector<16x16xf32>
    %61 = arith.addf %55, %60 : vector<16x16xf32>
    %62 = vector.extract_strided_slice %7 {offsets = [4, 0, 0], sizes = [1, 16, 16], strides = [1, 1, 1]} : vector<8x16x16xf32> to vector<1x16x16xf32>
    %63 = vector.shape_cast %62 : vector<1x16x16xf32> to vector<16x16xf32>
    %c0_21 = arith.constant 0 : index
    %c4 = arith.constant 4 : index
    %64 = memref.load %arg1[%c0_21, %c4] : memref<3x9xf32, #tpu.memory_space<smem>>
    %65 = vector.broadcast %64 : f32 to vector<16x16xf32>
    %66 = arith.mulf %63, %65 : vector<16x16xf32>
    %67 = arith.addf %61, %66 : vector<16x16xf32>
    %68 = vector.extract_strided_slice %7 {offsets = [5, 0, 0], sizes = [1, 16, 16], strides = [1, 1, 1]} : vector<8x16x16xf32> to vector<1x16x16xf32>
    %69 = vector.shape_cast %68 : vector<1x16x16xf32> to vector<16x16xf32>
    %c0_22 = arith.constant 0 : index
    %c5 = arith.constant 5 : index
    %70 = memref.load %arg1[%c0_22, %c5] : memref<3x9xf32, #tpu.memory_space<smem>>
    %71 = vector.broadcast %70 : f32 to vector<16x16xf32>
    %72 = arith.mulf %69, %71 : vector<16x16xf32>
    %73 = arith.addf %67, %72 : vector<16x16xf32>
    %74 = vector.extract_strided_slice %7 {offsets = [6, 0, 0], sizes = [1, 16, 16], strides = [1, 1, 1]} : vector<8x16x16xf32> to vector<1x16x16xf32>
    %75 = vector.shape_cast %74 : vector<1x16x16xf32> to vector<16x16xf32>
    %c0_23 = arith.constant 0 : index
    %c6 = arith.constant 6 : index
    %76 = memref.load %arg1[%c0_23, %c6] : memref<3x9xf32, #tpu.memory_space<smem>>
    %77 = vector.broadcast %76 : f32 to vector<16x16xf32>
    %78 = arith.mulf %75, %77 : vector<16x16xf32>
    %79 = arith.addf %73, %78 : vector<16x16xf32>
    %80 = vector.extract_strided_slice %7 {offsets = [7, 0, 0], sizes = [1, 16, 16], strides = [1, 1, 1]} : vector<8x16x16xf32> to vector<1x16x16xf32>
    %81 = vector.shape_cast %80 : vector<1x16x16xf32> to vector<16x16xf32>
    %c0_24 = arith.constant 0 : index
    %c7 = arith.constant 7 : index
    %82 = memref.load %arg1[%c0_24, %c7] : memref<3x9xf32, #tpu.memory_space<smem>>
    %83 = vector.broadcast %82 : f32 to vector<16x16xf32>
    %84 = arith.mulf %81, %83 : vector<16x16xf32>
    %85 = arith.addf %79, %84 : vector<16x16xf32>
    %c0_25 = arith.constant 0 : index
    %c8_26 = arith.constant 8 : index
    %86 = memref.load %arg1[%c0_25, %c8_26] : memref<3x9xf32, #tpu.memory_space<smem>>
    %87 = vector.broadcast %86 : f32 to vector<16x16xf32>
    %88 = arith.mulf %35, %87 : vector<16x16xf32>
    %89 = arith.addf %85, %88 : vector<16x16xf32>
    %c0_27 = arith.constant 0 : index
    %90 = memref.load %arg2[%c0_27] : memref<3xf32, #tpu.memory_space<smem>>
    %91 = vector.broadcast %90 : f32 to vector<16x16xf32>
    %92 = arith.addf %89, %91 : vector<16x16xf32>
    %93 = math.tanh %92 : vector<16x16xf32>
    %c0_28 = arith.constant 0 : index
    %c0_29 = arith.constant 0 : index
    %c0_30 = arith.constant 0 : index
    %c0_31 = arith.constant 0 : index
    %94 = vector.load %arg6[%c0_28, %c0_29, %c0_30, %c0_31] : memref<1x3x16x16xf32, #tpu.memory_space<vmem>>, vector<1x1x16x16xf32>
    %95 = vector.shape_cast %94 : vector<1x1x16x16xf32> to vector<16x16xf32>
    %96 = vector.shape_cast %93 : vector<16x16xf32> to vector<1x1x16x16xf32>
    tpu.vector_store %arg6[%c0_28, %c0_29, %c0_30, %c0_31], %96 {strides = array<i32>} : memref<1x3x16x16xf32, #tpu.memory_space<vmem>>, vector<1x1x16x16xf32>,
    %97 = vector.extract_strided_slice %7 {offsets = [0, 0, 0], sizes = [1, 16, 16], strides = [1, 1, 1]} : vector<8x16x16xf32> to vector<1x16x16xf32>
    %98 = vector.shape_cast %97 : vector<1x16x16xf32> to vector<16x16xf32>
    %c1_32 = arith.constant 1 : index
    %c0_33 = arith.constant 0 : index
    %99 = memref.load %arg1[%c1_32, %c0_33] : memref<3x9xf32, #tpu.memory_space<smem>>
    %100 = vector.broadcast %99 : f32 to vector<16x16xf32>
    %101 = arith.mulf %98, %100 : vector<16x16xf32>
    %102 = vector.extract_strided_slice %7 {offsets = [1, 0, 0], sizes = [1, 16, 16], strides = [1, 1, 1]} : vector<8x16x16xf32> to vector<1x16x16xf32>
    %103 = vector.shape_cast %102 : vector<1x16x16xf32> to vector<16x16xf32>
    %c1_34 = arith.constant 1 : index
    %c1_35 = arith.constant 1 : index
    %104 = memref.load %arg1[%c1_34, %c1_35] : memref<3x9xf32, #tpu.memory_space<smem>>
    %105 = vector.broadcast %104 : f32 to vector<16x16xf32>
    %106 = arith.mulf %103, %105 : vector<16x16xf32>
    %107 = arith.addf %101, %106 : vector<16x16xf32>
    %108 = vector.extract_strided_slice %7 {offsets = [2, 0, 0], sizes = [1, 16, 16], strides = [1, 1, 1]} : vector<8x16x16xf32> to vector<1x16x16xf32>
    %109 = vector.shape_cast %108 : vector<1x16x16xf32> to vector<16x16xf32>
    %c1_36 = arith.constant 1 : index
    %c2_37 = arith.constant 2 : index
    %110 = memref.load %arg1[%c1_36, %c2_37] : memref<3x9xf32, #tpu.memory_space<smem>>
    %111 = vector.broadcast %110 : f32 to vector<16x16xf32>
    %112 = arith.mulf %109, %111 : vector<16x16xf32>
    %113 = arith.addf %107, %112 : vector<16x16xf32>
    %114 = vector.extract_strided_slice %7 {offsets = [3, 0, 0], sizes = [1, 16, 16], strides = [1, 1, 1]} : vector<8x16x16xf32> to vector<1x16x16xf32>
    %115 = vector.shape_cast %114 : vector<1x16x16xf32> to vector<16x16xf32>
    %c1_38 = arith.constant 1 : index
    %c3_39 = arith.constant 3 : index
    %116 = memref.load %arg1[%c1_38, %c3_39] : memref<3x9xf32, #tpu.memory_space<smem>>
    %117 = vector.broadcast %116 : f32 to vector<16x16xf32>
    %118 = arith.mulf %115, %117 : vector<16x16xf32>
    %119 = arith.addf %113, %118 : vector<16x16xf32>
    %120 = vector.extract_strided_slice %7 {offsets = [4, 0, 0], sizes = [1, 16, 16], strides = [1, 1, 1]} : vector<8x16x16xf32> to vector<1x16x16xf32>
    %121 = vector.shape_cast %120 : vector<1x16x16xf32> to vector<16x16xf32>
    %c1_40 = arith.constant 1 : index
    %c4_41 = arith.constant 4 : index
    %122 = memref.load %arg1[%c1_40, %c4_41] : memref<3x9xf32, #tpu.memory_space<smem>>
    %123 = vector.broadcast %122 : f32 to vector<16x16xf32>
    %124 = arith.mulf %121, %123 : vector<16x16xf32>
    %125 = arith.addf %119, %124 : vector<16x16xf32>
    %126 = vector.extract_strided_slice %7 {offsets = [5, 0, 0], sizes = [1, 16, 16], strides = [1, 1, 1]} : vector<8x16x16xf32> to vector<1x16x16xf32>
    %127 = vector.shape_cast %126 : vector<1x16x16xf32> to vector<16x16xf32>
    %c1_42 = arith.constant 1 : index
    %c5_43 = arith.constant 5 : index
    %128 = memref.load %arg1[%c1_42, %c5_43] : memref<3x9xf32, #tpu.memory_space<smem>>
    %129 = vector.broadcast %128 : f32 to vector<16x16xf32>
    %130 = arith.mulf %127, %129 : vector<16x16xf32>
    %131 = arith.addf %125, %130 : vector<16x16xf32>
    %132 = vector.extract_strided_slice %7 {offsets = [6, 0, 0], sizes = [1, 16, 16], strides = [1, 1, 1]} : vector<8x16x16xf32> to vector<1x16x16xf32>
    %133 = vector.shape_cast %132 : vector<1x16x16xf32> to vector<16x16xf32>
    %c1_44 = arith.constant 1 : index
    %c6_45 = arith.constant 6 : index
    %134 = memref.load %arg1[%c1_44, %c6_45] : memref<3x9xf32, #tpu.memory_space<smem>>
    %135 = vector.broadcast %134 : f32 to vector<16x16xf32>
    %136 = arith.mulf %133, %135 : vector<16x16xf32>
    %137 = arith.addf %131, %136 : vector<16x16xf32>
    %138 = vector.extract_strided_slice %7 {offsets = [7, 0, 0], sizes = [1, 16, 16], strides = [1, 1, 1]} : vector<8x16x16xf32> to vector<1x16x16xf32>
    %139 = vector.shape_cast %138 : vector<1x16x16xf32> to vector<16x16xf32>
    %c1_46 = arith.constant 1 : index
    %c7_47 = arith.constant 7 : index
    %140 = memref.load %arg1[%c1_46, %c7_47] : memref<3x9xf32, #tpu.memory_space<smem>>
    %141 = vector.broadcast %140 : f32 to vector<16x16xf32>
    %142 = arith.mulf %139, %141 : vector<16x16xf32>
    %143 = arith.addf %137, %142 : vector<16x16xf32>
    %c1_48 = arith.constant 1 : index
    %c8_49 = arith.constant 8 : index
    %144 = memref.load %arg1[%c1_48, %c8_49] : memref<3x9xf32, #tpu.memory_space<smem>>
    %145 = vector.broadcast %144 : f32 to vector<16x16xf32>
    %146 = arith.mulf %35, %145 : vector<16x16xf32>
    %147 = arith.addf %143, %146 : vector<16x16xf32>
    %c1_50 = arith.constant 1 : index
    %148 = memref.load %arg2[%c1_50] : memref<3xf32, #tpu.memory_space<smem>>
    %149 = vector.broadcast %148 : f32 to vector<16x16xf32>
    %150 = arith.addf %147, %149 : vector<16x16xf32>
    %151 = math.tanh %150 : vector<16x16xf32>
    %c0_51 = arith.constant 0 : index
    %c1_52 = arith.constant 1 : index
    %c0_53 = arith.constant 0 : index
    %c0_54 = arith.constant 0 : index
    %152 = vector.load %arg6[%c0_51, %c1_52, %c0_53, %c0_54] : memref<1x3x16x16xf32, #tpu.memory_space<vmem>>, vector<1x1x16x16xf32>
    %153 = vector.shape_cast %152 : vector<1x1x16x16xf32> to vector<16x16xf32>
    %154 = vector.shape_cast %151 : vector<16x16xf32> to vector<1x1x16x16xf32>
    tpu.vector_store %arg6[%c0_51, %c1_52, %c0_53, %c0_54], %154 {strides = array<i32>} : memref<1x3x16x16xf32, #tpu.memory_space<vmem>>, vector<1x1x16x16xf32>,
    %155 = vector.extract_strided_slice %7 {offsets = [0, 0, 0], sizes = [1, 16, 16], strides = [1, 1, 1]} : vector<8x16x16xf32> to vector<1x16x16xf32>
    %156 = vector.shape_cast %155 : vector<1x16x16xf32> to vector<16x16xf32>
    %c2_55 = arith.constant 2 : index
    %c0_56 = arith.constant 0 : index
    %157 = memref.load %arg1[%c2_55, %c0_56] : memref<3x9xf32, #tpu.memory_space<smem>>
    %158 = vector.broadcast %157 : f32 to vector<16x16xf32>
    %159 = arith.mulf %156, %158 : vector<16x16xf32>
    %160 = vector.extract_strided_slice %7 {offsets = [1, 0, 0], sizes = [1, 16, 16], strides = [1, 1, 1]} : vector<8x16x16xf32> to vector<1x16x16xf32>
    %161 = vector.shape_cast %160 : vector<1x16x16xf32> to vector<16x16xf32>
    %c2_57 = arith.constant 2 : index
    %c1_58 = arith.constant 1 : index
    %162 = memref.load %arg1[%c2_57, %c1_58] : memref<3x9xf32, #tpu.memory_space<smem>>
    %163 = vector.broadcast %162 : f32 to vector<16x16xf32>
    %164 = arith.mulf %161, %163 : vector<16x16xf32>
    %165 = arith.addf %159, %164 : vector<16x16xf32>
    %166 = vector.extract_strided_slice %7 {offsets = [2, 0, 0], sizes = [1, 16, 16], strides = [1, 1, 1]} : vector<8x16x16xf32> to vector<1x16x16xf32>
    %167 = vector.shape_cast %166 : vector<1x16x16xf32> to vector<16x16xf32>
    %c2_59 = arith.constant 2 : index
    %c2_60 = arith.constant 2 : index
    %168 = memref.load %arg1[%c2_59, %c2_60] : memref<3x9xf32, #tpu.memory_space<smem>>
    %169 = vector.broadcast %168 : f32 to vector<16x16xf32>
    %170 = arith.mulf %167, %169 : vector<16x16xf32>
    %171 = arith.addf %165, %170 : vector<16x16xf32>
    %172 = vector.extract_strided_slice %7 {offsets = [3, 0, 0], sizes = [1, 16, 16], strides = [1, 1, 1]} : vector<8x16x16xf32> to vector<1x16x16xf32>
    %173 = vector.shape_cast %172 : vector<1x16x16xf32> to vector<16x16xf32>
    %c2_61 = arith.constant 2 : index
    %c3_62 = arith.constant 3 : index
    %174 = memref.load %arg1[%c2_61, %c3_62] : memref<3x9xf32, #tpu.memory_space<smem>>
    %175 = vector.broadcast %174 : f32 to vector<16x16xf32>
    %176 = arith.mulf %173, %175 : vector<16x16xf32>
    %177 = arith.addf %171, %176 : vector<16x16xf32>
    %178 = vector.extract_strided_slice %7 {offsets = [4, 0, 0], sizes = [1, 16, 16], strides = [1, 1, 1]} : vector<8x16x16xf32> to vector<1x16x16xf32>
    %179 = vector.shape_cast %178 : vector<1x16x16xf32> to vector<16x16xf32>
    %c2_63 = arith.constant 2 : index
    %c4_64 = arith.constant 4 : index
    %180 = memref.load %arg1[%c2_63, %c4_64] : memref<3x9xf32, #tpu.memory_space<smem>>
    %181 = vector.broadcast %180 : f32 to vector<16x16xf32>
    %182 = arith.mulf %179, %181 : vector<16x16xf32>
    %183 = arith.addf %177, %182 : vector<16x16xf32>
    %184 = vector.extract_strided_slice %7 {offsets = [5, 0, 0], sizes = [1, 16, 16], strides = [1, 1, 1]} : vector<8x16x16xf32> to vector<1x16x16xf32>
    %185 = vector.shape_cast %184 : vector<1x16x16xf32> to vector<16x16xf32>
    %c2_65 = arith.constant 2 : index
    %c5_66 = arith.constant 5 : index
    %186 = memref.load %arg1[%c2_65, %c5_66] : memref<3x9xf32, #tpu.memory_space<smem>>
    %187 = vector.broadcast %186 : f32 to vector<16x16xf32>
    %188 = arith.mulf %185, %187 : vector<16x16xf32>
    %189 = arith.addf %183, %188 : vector<16x16xf32>
    %190 = vector.extract_strided_slice %7 {offsets = [6, 0, 0], sizes = [1, 16, 16], strides = [1, 1, 1]} : vector<8x16x16xf32> to vector<1x16x16xf32>
    %191 = vector.shape_cast %190 : vector<1x16x16xf32> to vector<16x16xf32>
    %c2_67 = arith.constant 2 : index
    %c6_68 = arith.constant 6 : index
    %192 = memref.load %arg1[%c2_67, %c6_68] : memref<3x9xf32, #tpu.memory_space<smem>>
    %193 = vector.broadcast %192 : f32 to vector<16x16xf32>
    %194 = arith.mulf %191, %193 : vector<16x16xf32>
    %195 = arith.addf %189, %194 : vector<16x16xf32>
    %196 = vector.extract_strided_slice %7 {offsets = [7, 0, 0], sizes = [1, 16, 16], strides = [1, 1, 1]} : vector<8x16x16xf32> to vector<1x16x16xf32>
    %197 = vector.shape_cast %196 : vector<1x16x16xf32> to vector<16x16xf32>
    %c2_69 = arith.constant 2 : index
    %c7_70 = arith.constant 7 : index
    %198 = memref.load %arg1[%c2_69, %c7_70] : memref<3x9xf32, #tpu.memory_space<smem>>
    %199 = vector.broadcast %198 : f32 to vector<16x16xf32>
    %200 = arith.mulf %197, %199 : vector<16x16xf32>
    %201 = arith.addf %195, %200 : vector<16x16xf32>
    %c2_71 = arith.constant 2 : index
    %c8_72 = arith.constant 8 : index
    %202 = memref.load %arg1[%c2_71, %c8_72] : memref<3x9xf32, #tpu.memory_space<smem>>
    %203 = vector.broadcast %202 : f32 to vector<16x16xf32>
    %204 = arith.mulf %35, %203 : vector<16x16xf32>
    %205 = arith.addf %201, %204 : vector<16x16xf32>
    %c2_73 = arith.constant 2 : index
    %206 = memref.load %arg2[%c2_73] : memref<3xf32, #tpu.memory_space<smem>>
    %207 = vector.broadcast %206 : f32 to vector<16x16xf32>
    %208 = arith.addf %205, %207 : vector<16x16xf32>
    %209 = math.tanh %208 : vector<16x16xf32>
    %c0_74 = arith.constant 0 : index
    %c2_75 = arith.constant 2 : index
    %c0_76 = arith.constant 0 : index
    %c0_77 = arith.constant 0 : index
    %210 = vector.load %arg6[%c0_74, %c2_75, %c0_76, %c0_77] : memref<1x3x16x16xf32, #tpu.memory_space<vmem>>, vector<1x1x16x16xf32>
    %211 = vector.shape_cast %210 : vector<1x1x16x16xf32> to vector<16x16xf32>
    %212 = vector.shape_cast %209 : vector<16x16xf32> to vector<1x1x16x16xf32>
    tpu.vector_store %arg6[%c0_74, %c2_75, %c0_76, %c0_77], %212 {strides = array<i32>} : memref<1x3x16x16xf32, #tpu.memory_space<vmem>>, vector<1x1x16x16xf32>,
    return
  }
  func.func @transform_0(%arg0: i32) -> (i32, i32) {
    %c0_i32 = arith.constant 0 : i32
    %c0_i32_0 = arith.constant 0 : i32
    %c0_i32_1 = arith.constant 0 : i32
    return %c0_i32, %c0_i32_0 : i32, i32
  }
  func.func @transform_1(%arg0: i32) -> i32 {
    %c0_i32 = arith.constant 0 : i32
    %c0_i32_0 = arith.constant 0 : i32
    return %c0_i32 : i32
  }
  func.func @transform_2(%arg0: i32) -> (i32, i32, i32, i32) {
    %c0_i32 = arith.constant 0 : i32
    %c0_i32_0 = arith.constant 0 : i32
    %c0_i32_1 = arith.constant 0 : i32
    %c0_i32_2 = arith.constant 0 : i32
    return %arg0, %c0_i32, %c0_i32_0, %c0_i32_1 : i32, i32, i32, i32
  }
  func.func @transform_3(%arg0: i32) -> (i32, i32, i32, i32) {
    %c0_i32 = arith.constant 0 : i32
    %c0_i32_0 = arith.constant 0 : i32
    %c0_i32_1 = arith.constant 0 : i32
    %c0_i32_2 = arith.constant 0 : i32
    return %arg0, %c0_i32, %c0_i32_0, %c0_i32_1 : i32, i32, i32, i32
  }
  func.func @transform_4(%arg0: i32) -> (i32, i32, i32, i32) {
    %c0_i32 = arith.constant 0 : i32
    %c0_i32_0 = arith.constant 0 : i32
    %c0_i32_1 = arith.constant 0 : i32
    %c0_i32_2 = arith.constant 0 : i32
    return %arg0, %c0_i32, %c0_i32_0, %c0_i32_1 : i32, i32, i32, i32
  }
  func.func @transform_5(%arg0: i32) -> (i32, i32, i32, i32) {
    %c0_i32 = arith.constant 0 : i32
    %c0_i32_0 = arith.constant 0 : i32
    %c0_i32_1 = arith.constant 0 : i32
    %c0_i32_2 = arith.constant 0 : i32
    return %arg0, %c0_i32, %c0_i32_0, %c0_i32_1 : i32, i32, i32, i32
  }
}

</mosaic_0001>

<llo_original>
// kernel: tpu_custom_call.1
$region0: #{tpu_custom_call.1}
  #allocation0 [shape = 'u32[]', space=smem, size = 0x4, offset = 0x4, fixed_abs, tag = 'smem constant byte address 0x4 - core index']
  #allocation1 [shape = 'u32[144,128]{1,0:T(1,128)}', space=vmem, size = 0x12000, scoped, tag = 'internal scratch']
  %s0 = inlined_call_operand.hbm [shape: f32[3,9], index: 0, kind: input, shape index: {}]
  %s1 = inlined_call_operand.vmem [shape: f32[3], index: 1, kind: input, shape index: {}]
  %s2 = inlined_call_operand.hbm [shape: s32[2,1,16,16], index: 2, kind: input, shape index: {}]
  %s3 = inlined_call_operand.hbm [shape: s32[2,1,16,16], index: 3, kind: input, shape index: {}]
  %s4 = inlined_call_operand.hbm [shape: f32[2,9,16,16], index: 4, kind: output, shape index: {0}]
  %s5 = inlined_call_operand.hbm [shape: f32[2,3,16,16], index: 5, kind: output, shape index: {1}]
  %6 = xla_tuple %s4, %s5
  %s7 = sld [smem:[#allocation0]]
  $region73: #{tpu_custom_call.1} parent=0
    _
  %s9 = ssub.s32 1, %s7
  %s10 = scalar_select 0, %s9, %s7
  $region1: #{tpu_custom_call.1} parent=0
    #allocation2 [shape = 'u8[2048]{0}', space=smem, size = 0x800, scoped, tag = 'input window, operand 0, single buffered']
    #allocation3 [shape = 's32[2]{0}', space=sflag, size = 0x8, scoped, tag = 'scoped memory for tpu_custom_call.1']
    #allocation4 [shape = 's32[2]{0}', space=sflag, size = 0x8, scoped, tag = 'scoped memory for tpu_custom_call.1']
    #allocation5 [shape = 's32[2]{0}', space=sflag, size = 0x8, scoped, tag = 'scoped memory for tpu_custom_call.1']
    #allocation6 [shape = 's32[2]{0}', space=sflag, size = 0x8, scoped, tag = 'scoped memory for tpu_custom_call.1']
    #allocation7 [shape = 'u8[512]{0}', space=smem, size = 0x200, scoped, tag = 'input window, operand 1, single buffered']
    #allocation8 [shape = 'u8[16384]{0}', space=vmem, size = 0x4000, scoped, tag = 'input window, operand 2']
    #allocation9 [shape = 'u8[16384]{0}', space=vmem, size = 0x4000, scoped, tag = 'input window, operand 3']
    #allocation10 [shape = 's32[2]{0}', space=sflag, size = 0x8, scoped, tag = 'scoped memory for tpu_custom_call.1']
    #allocation11 [shape = 'u8[147456]{0}', space=vmem, size = 0x24000, scoped, tag = 'output window, operand 0']
    #allocation12 [shape = 'u8[49152]{0}', space=vmem, size = 0xc000, scoped, tag = 'output window, operand 1']
    #allocation13 [shape = 's32[2]{0}', space=sflag, size = 0x8, scoped, tag = 'scoped memory for tpu_custom_call.1']
    %11 = vsyncpa [#allocation5], 0
    %12 = vsyncpa [#allocation6], 0
    %13 = vsyncpa [#allocation3], 0
    %s14 = scalar_lea.sflag [#allocation3], 1
    %15 = vsyncpa %s14, 0
    %16 = vsyncpa [#allocation10], 0
    %s17 = scalar_lea.sflag [#allocation10], 1
    %18 = vsyncpa %s17, 0
    %19 = vsyncpa [#allocation4], 0
    %s20 = scalar_lea.sflag [#allocation4], 1
    %21 = vsyncpa %s20, 0
    %22 = vsyncpa [#allocation13], 0
    %s23 = scalar_lea.sflag [#allocation13], 1
    %24 = vsyncpa %s23, 0
    loop: start=0, step=1, limit=4
    $region2: #{tpu_custom_call.1} parent=1 // loop_pre_header
      _
    $region3: #{tpu_custom_call.1} parent=1 // loop_header
      %s26 = sphi 0, %s30
      %p27 = scmp.ge.s32.totalorder %s26, 4
      %s34 = sphi 0, %s34
      %s36 = sphi 0, %s34
      %s37 = sphi 0, %s36
      %s51 = sphi 0, %s37
      %s55 = sphi 0, %s55
      %s57 = sphi 0, %s55
      %s58 = sphi 0, %s57
      %s72 = sphi 0, %s58
      %s78 = sphi 0, %s80
      %s81 = sphi 0, %s78
      %s82 = sphi 0, %s81
      %s98 = sphi 0, %s82
      %s104 = sphi 0, %s106
      %s107 = sphi 0, %s104
      %s108 = sphi 0, %s107
      %s124 = sphi 0, %s108
      %s130 = sphi 0, %s132
      %s133 = sphi 0, %s130
      %s134 = sphi 0, %s133
      %s150 = sphi 0, %s134
      %s156 = sphi 0, %s158
      %s159 = sphi 0, %s156
      %s160 = sphi 0, %s159
      %s176 = sphi 0, %s160
    $region4: #{tpu_custom_call.1} parent=1 // loop_header_branch
      %29 = sbr.rel (%p27) target = $region8
    $region5: #{tpu_custom_call.1} parent=1 // loop_body
      %s31 = ssub.s32 %s26, 1
      %s32 = ssub.s32 %s26, 2
      %s33 = sadd.s32 %s26, 1
      %s35 = sadd.s32 %s34, 1
      %p38 = scmp.eq.s32.totalorder %s26, 1
      %p39 = scmp.ne.s32.totalorder %s34, %s36
      %p40 = scmp.eq.s32.totalorder %s26, 0
      %p41 = por %p39, %p40
      %p42 = scmp.ne.s32.totalorder %s34, %s36
      %p43 = scmp.eq.s32.totalorder %s31, 1
      %p44 = por %p42, %p43
      %p45 = scmp.ne.s32.totalorder %s36, %s37
      %p46 = scmp.eq.s32.totalorder %s31, 0
      %p47 = por %p45, %p46
      %p48 = scmp.ne.s32.totalorder %s36, %s37
      %p49 = scmp.eq.s32.totalorder %s32, 1
      %p50 = por %p48, %p49
      %p52 = scmp.ne.s32.totalorder %s37, %s51
      %p53 = scmp.eq.s32.totalorder %s32, 0
      %p54 = por %p52, %p53
      %s56 = sadd.s32 %s55, 1
      %p59 = scmp.eq.s32.totalorder %s26, 1
      %p60 = scmp.ne.s32.totalorder %s55, %s57
      %p61 = scmp.eq.s32.totalorder %s26, 0
      %p62 = por %p60, %p61
      %p63 = scmp.ne.s32.totalorder %s55, %s57
      %p64 = scmp.eq.s32.totalorder %s31, 1
      %p65 = por %p63, %p64
      %p66 = scmp.ne.s32.totalorder %s57, %s58
      %p67 = scmp.eq.s32.totalorder %s31, 0
      %p68 = por %p66, %p67
      %p69 = scmp.ne.s32.totalorder %s57, %s58
      %p70 = scmp.eq.s32.totalorder %s32, 1
      %p71 = por %p69, %p70
      %p73 = scmp.ne.s32.totalorder %s58, %s72
      %p74 = scmp.eq.s32.totalorder %s32, 0
      %p75 = por %p73, %p74
      %s76 = ssub.s32 %s26, %s33
      %p77 = scmp.eq.s32.totalorder %s76, 0
      %s79 = sadd.s32 %s78, 1
      %s80 = scalar_select %p77, %s78, %s79
      %p83 = pneg %p77
      %p84 = scmp.eq.s32.totalorder %s26, 1
      %p85 = por %p83, %p84
      %p86 = scmp.ne.s32.totalorder %s78, %s81
      %p87 = scmp.eq.s32.totalorder %s26, 0
      %p88 = por %p86, %p87
      %p89 = scmp.ne.s32.totalorder %s78, %s81
      %p90 = scmp.eq.s32.totalorder %s31, 1
      %p91 = por %p89, %p90
      %p92 = scmp.ne.s32.totalorder %s81, %s82
      %p93 = scmp.eq.s32.totalorder %s31, 0
      %p94 = por %p92, %p93
      %p95 = scmp.ne.s32.totalorder %s81, %s82
      %p96 = scmp.eq.s32.totalorder %s32, 1
      %p97 = por %p95, %p96
      %p99 = scmp.ne.s32.totalorder %s82, %s98
      %p100 = scmp.eq.s32.totalorder %s32, 0
      %p101 = por %p99, %p100
      %s102 = ssub.s32 %s26, %s33
      %p103 = scmp.eq.s32.totalorder %s102, 0
      %s105 = sadd.s32 %s104, 1
      %s106 = scalar_select %p103, %s104, %s105
      %p109 = pneg %p103
      %p110 = scmp.eq.s32.totalorder %s26, 1
      %p111 = por %p109, %p110
      %p112 = scmp.ne.s32.totalorder %s104, %s107
      %p113 = scmp.eq.s32.totalorder %s26, 0
      %p114 = por %p112, %p113
      %p115 = scmp.ne.s32.totalorder %s104, %s107
      %p116 = scmp.eq.s32.totalorder %s31, 1
      %p117 = por %p115, %p116
      %p118 = scmp.ne.s32.totalorder %s107, %s108
      %p119 = scmp.eq.s32.totalorder %s31, 0
      %p120 = por %p118, %p119
      %p121 = scmp.ne.s32.totalorder %s107, %s108
      %p122 = scmp.eq.s32.totalorder %s32, 1
      %p123 = por %p121, %p122
      %p125 = scmp.ne.s32.totalorder %s108, %s124
      %p126 = scmp.eq.s32.totalorder %s32, 0
      %p127 = por %p125, %p126
      %s128 = ssub.s32 %s26, %s33
      %p129 = scmp.eq.s32.totalorder %s128, 0
      %s131 = sadd.s32 %s130, 1
      %s132 = scalar_select %p129, %s130, %s131
      %p135 = pneg %p129
      %p136 = scmp.eq.s32.totalorder %s26, 1
      %p137 = por %p135, %p136
      %p138 = scmp.ne.s32.totalorder %s130, %s133
      %p139 = scmp.eq.s32.totalorder %s26, 0
      %p140 = por %p138, %p139
      %p141 = scmp.ne.s32.totalorder %s130, %s133
      %p142 = scmp.eq.s32.totalorder %s31, 1
      %p143 = por %p141, %p142
      %p144 = scmp.ne.s32.totalorder %s133, %s134
      %p145 = scmp.eq.s32.totalorder %s31, 0
      %p146 = por %p144, %p145
      %p147 = scmp.ne.s32.totalorder %s133, %s134
      %p148 = scmp.eq.s32.totalorder %s32, 1
      %p149 = por %p147, %p148
      %p151 = scmp.ne.s32.totalorder %s134, %s150
      %p152 = scmp.eq.s32.totalorder %s32, 0
      %p153 = por %p151, %p152
      %s154 = ssub.s32 %s26, %s33
      %p155 = scmp.eq.s32.totalorder %s154, 0
      %s157 = sadd.s32 %s156, 1
      %s158 = scalar_select %p155, %s156, %s157
      %p161 = pneg %p155
      %p162 = scmp.eq.s32.totalorder %s26, 1
      %p163 = por %p161, %p162
      %p164 = scmp.ne.s32.totalorder %s156, %s159
      %p165 = scmp.eq.s32.totalorder %s26, 0
      %p166 = por %p164, %p165
      %p167 = scmp.ne.s32.totalorder %s156, %s159
      %p168 = scmp.eq.s32.totalorder %s31, 1
      %p169 = por %p167, %p168
      %p170 = scmp.ne.s32.totalorder %s159, %s160
      %p171 = scmp.eq.s32.totalorder %s31, 0
      %p172 = por %p170, %p171
      %p173 = scmp.ne.s32.totalorder %s159, %s160
      %p174 = scmp.eq.s32.totalorder %s32, 1
      %p175 = por %p173, %p174
      %p177 = scmp.ne.s32.totalorder %s160, %s176
      %p178 = scmp.eq.s32.totalorder %s32, 0
      %p179 = por %p177, %p178
      %p180 = scmp.le.s32.totalorder 1, %s26
      %p181 = scmp.lt.s32.totalorder %s26, 3
      %p182 = pnand %p180, %p181
      %p183 = pneg %p182
      // Predicated region
      $region9: #{tpu_custom_call.1} parent=5 // pred_check
        _
      $region10: #{tpu_custom_call.1} parent=5 // pred_check_branch
        %185 = sbr.rel (%p182) target = $region12
      $region11: #{tpu_custom_call.1} parent=5 // pred_region
        %s186 = ssub.s32 %s26, 1
        // Predicated region
        $region13: #{tpu_custom_call.1} parent=11 // pred_check
          %p187 = pneg %p47
        $region14: #{tpu_custom_call.1} parent=11 // pred_check_branch
          %189 = sbr.rel (%p187) target = $region16
        $region15: #{tpu_custom_call.1} parent=11 // pred_region
          %s191 = ssub.s32 64, 64
          %192 = vsyncadd [#allocation5], %s191
          %195 = dma.hbm_to_smem %s0, 64, [#allocation2], [#allocation5]
        $region16: #{tpu_custom_call.1} parent=11 // pred_fallthru
          _
        // Predicated region
        $region17: #{tpu_custom_call.1} parent=11 // pred_check
          %p196 = pneg %p68
        $region18: #{tpu_custom_call.1} parent=11 // pred_check_branch
          %198 = sbr.rel (%p196) target = $region20
        $region19: #{tpu_custom_call.1} parent=11 // pred_region
          %s200 = ssub.s32 16, 16
          %201 = vsyncadd [#allocation6], %s200
          %s203 = sshll.u32 %s1, 4
          %s204 = int_to_ptr.vmem [resolvable:$true] %s203
          %206 = dma.vmem_to_smem %s204, 16, [#allocation7], [#allocation6]
        $region20: #{tpu_custom_call.1} parent=11 // pred_fallthru
          _
      $region12: #{tpu_custom_call.1} parent=5 // pred_fallthru
        _
      %p207 = scmp.lt.s32.totalorder %s26, 2
      // Predicated region
      $region21: #{tpu_custom_call.1} parent=5 // pred_check
        %p208 = pneg %p207
      $region22: #{tpu_custom_call.1} parent=5 // pred_check_branch
        %210 = sbr.rel (%p208) target = $region24
      $region23: #{tpu_custom_call.1} parent=5 // pred_region
        // Predicated region
        $region25: #{tpu_custom_call.1} parent=23 // pred_check
          %p211 = pneg %p88
        $region26: #{tpu_custom_call.1} parent=23 // pred_check_branch
          %213 = sbr.rel (%p211) target = $region28
        $region27: #{tpu_custom_call.1} parent=23 // pred_region
          %s214 = sand.u32 %s78, 1
          %s215 = scalar_lea.sflag [#allocation3], %s214
          %s216 = sand.u32 %s78, 1
          %s217 = smul.addr %s216, 16
          %s218 = scalar_lea.vmem [#allocation8], %s217
          %s220 = ssub.s32 256, 256
          %221 = vsyncadd %s215, %s220
          %s222 = smul.addr %s26, 2
          %s223 = smul.addr %s222, 128
          %s224 = scalar_lea.hbm %s2, %s223
          %s225 = sshll.u32 %s218, 4
          %s226 = int_to_ptr.vmem [resolvable:$true] %s225
          %231 = dma.hbm_to_vmem [thread:$0]  %s224, 256, %s226, %s215, 128, 128, 8
        $region28: #{tpu_custom_call.1} parent=23 // pred_fallthru
          _
        // Predicated region
        $region29: #{tpu_custom_call.1} parent=23 // pred_check
          %p232 = pneg %p114
        $region30: #{tpu_custom_call.1} parent=23 // pred_check_branch
          %234 = sbr.rel (%p232) target = $region32
        $region31: #{tpu_custom_call.1} parent=23 // pred_region
          %s235 = sand.u32 %s104, 1
          %s236 = scalar_lea.sflag [#allocation10], %s235
          %s237 = sand.u32 %s104, 1
          %s238 = smul.addr %s237, 16
          %s239 = scalar_lea.vmem [#allocation9], %s238
          %s241 = ssub.s32 256, 256
          %242 = vsyncadd %s236, %s241
          %s243 = smul.addr %s26, 2
          %s244 = smul.addr %s243, 128
          %s245 = scalar_lea.hbm %s3, %s244
          %s246 = sshll.u32 %s239, 4
          %s247 = int_to_ptr.vmem [resolvable:$true] %s246
          %252 = dma.hbm_to_vmem [thread:$0]  %s245, 256, %s247, %s236, 128, 128, 8
        $region32: #{tpu_custom_call.1} parent=23 // pred_fallthru
          _
      $region24: #{tpu_custom_call.1} parent=5 // pred_fallthru
        _
      %p253 = scmp.le.s32.totalorder 1, %s26
      %p254 = scmp.lt.s32.totalorder %s26, 3
      %p255 = pnand %p253, %p254
      %p256 = pneg %p255
      // Predicated region
      $region33: #{tpu_custom_call.1} parent=5 // pred_check
        _
      $region34: #{tpu_custom_call.1} parent=5 // pred_check_branch
        %258 = sbr.rel (%p255) target = $region36
      $region35: #{tpu_custom_call.1} parent=5 // pred_region
        %s259 = ssub.s32 %s26, 1
        // Predicated region
        $region37: #{tpu_custom_call.1} parent=35 // pred_check
          %p260 = pneg %p47
        $region38: #{tpu_custom_call.1} parent=35 // pred_check_branch
          %262 = sbr.rel (%p260) target = $region40
        $region39: #{tpu_custom_call.1} parent=35 // pred_region
          %263 = dma.done [#allocation5], 64
        $region40: #{tpu_custom_call.1} parent=35 // pred_fallthru
          _
        // Predicated region
        $region41: #{tpu_custom_call.1} parent=35 // pred_check
          %p264 = pneg %p68
        $region42: #{tpu_custom_call.1} parent=35 // pred_check_branch
          %266 = sbr.rel (%p264) target = $region44
        $region43: #{tpu_custom_call.1} parent=35 // pred_region
          %267 = dma.done [#allocation6], 16
        $region44: #{tpu_custom_call.1} parent=35 // pred_fallthru
          _
        %s268 = sand.u32 %s81, 1
        %s269 = scalar_lea.sflag [#allocation3], %s268
        %s270 = sand.u32 %s81, 1
        %s271 = smul.addr %s270, 16
        %s272 = scalar_lea.vmem [#allocation8], %s271
        // Predicated region
        $region45: #{tpu_custom_call.1} parent=35 // pred_check
          %p273 = pneg %p94
        $region46: #{tpu_custom_call.1} parent=35 // pred_check_branch
          %275 = sbr.rel (%p273) target = $region48
        $region47: #{tpu_custom_call.1} parent=35 // pred_region
          %276 = dma.done %s269, 256
        $region48: #{tpu_custom_call.1} parent=35 // pred_fallthru
          _
        %s277 = sand.u32 %s107, 1
        %s278 = scalar_lea.sflag [#allocation10], %s277
        %s279 = sand.u32 %s107, 1
        %s280 = smul.addr %s279, 16
        %s281 = scalar_lea.vmem [#allocation9], %s280
        // Predicated region
        $region49: #{tpu_custom_call.1} parent=35 // pred_check
          %p282 = pneg %p120
        $region50: #{tpu_custom_call.1} parent=35 // pred_check_branch
          %284 = sbr.rel (%p282) target = $region52
        $region51: #{tpu_custom_call.1} parent=35 // pred_region
          %285 = dma.done %s278, 256
        $region52: #{tpu_custom_call.1} parent=35 // pred_fallthru
          _
        %286 = sfence
        %p287 = pneg %p47
        %p288 = pneg %p44
        %p289 = pneg %p68
        %p290 = pneg %p65
        %s291 = sand.u32 %s81, 1
        %s292 = scalar_lea.sflag [#allocation3], %s291
        %s293 = sand.u32 %s81, 1
        %s294 = smul.addr %s293, 16
        %s295 = scalar_lea.vmem [#allocation8], %s294
        %p296 = pneg %p94
        %p297 = pneg %p91
        %s298 = sand.u32 %s107, 1
        %s299 = scalar_lea.sflag [#allocation10], %s298
        %s300 = sand.u32 %s107, 1
        %s301 = smul.addr %s300, 16
        %s302 = scalar_lea.vmem [#allocation9], %s301
        %p303 = pneg %p120
        %p304 = pneg %p117
        %p305 = pneg %p146
        %p306 = pneg %p143
        %s307 = sand.u32 %s133, 1
        %s308 = scalar_lea.sflag [#allocation4], %s307
        %s309 = sand.u32 %s133, 1
        %s310 = smul.addr %s309, 144
        %s311 = scalar_lea.vmem [#allocation11], %s310
        %p312 = pneg %p172
        %p313 = pneg %p169
        %s314 = sand.u32 %s159, 1
        %s315 = scalar_lea.sflag [#allocation13], %s314
        %s316 = sand.u32 %s159, 1
        %s317 = smul.addr %s316, 48
        %s318 = scalar_lea.vmem [#allocation12], %s317
        %v319 = vld [vmem:[%s272] sm:$0xff]
        %v320 = vld [vmem:[%s272 + $0x8] sm:$0xff]
        %vm321 = vcmp.eq.s32.totalorder %v319, 0
        %vm322 = vcmp.eq.s32.totalorder %v320, 0
        %vm323 = vcmp.eq.s32.totalorder %v319, 1
        %vm324 = vcmp.eq.s32.totalorder %v320, 1
        %vm325 = vcmp.eq.s32.totalorder %v319, 2
        %vm326 = vcmp.eq.s32.totalorder %v320, 2
        %vm327 = vcmp.eq.s32.totalorder %v319, 3
        %vm328 = vcmp.eq.s32.totalorder %v320, 3
        %vm329 = vcmp.eq.s32.totalorder %v319, 4
        %vm330 = vcmp.eq.s32.totalorder %v320, 4
        %vm331 = vcmp.eq.s32.totalorder %v319, 5
        %vm332 = vcmp.eq.s32.totalorder %v320, 5
        %vm333 = vcmp.eq.s32.totalorder %v319, 6
        %vm334 = vcmp.eq.s32.totalorder %v320, 6
        %vm335 = vcmp.eq.s32.totalorder %v319, 7
        %vm336 = vcmp.eq.s32.totalorder %v320, 7
        %v337 = vsel %vm321, 1, 0
        %v338 = vsel %vm322, 1, 0
        %v339 = vsel %vm323, 1, 0
        %v340 = vsel %vm324, 1, 0
        %v341 = vsel %vm325, 1, 0
        %v342 = vsel %vm326, 1, 0
        %v343 = vsel %vm327, 1, 0
        %v344 = vsel %vm328, 1, 0
        %v345 = vsel %vm329, 1, 0
        %v346 = vsel %vm330, 1, 0
        %v347 = vsel %vm331, 1, 0
        %v348 = vsel %vm332, 1, 0
        %v349 = vsel %vm333, 1, 0
        %v350 = vsel %vm334, 1, 0
        %v351 = vsel %vm335, 1, 0
        %v352 = vsel %vm336, 1, 0
        %v353 = vcvt.s32.f32 %v337
        %v354 = vcvt.s32.f32 %v338
        %v355 = vcvt.s32.f32 %v339
        %v356 = vcvt.s32.f32 %v340
        %v357 = vcvt.s32.f32 %v341
        %v358 = vcvt.s32.f32 %v342
        %v359 = vcvt.s32.f32 %v343
        %v360 = vcvt.s32.f32 %v344
        %v361 = vcvt.s32.f32 %v345
        %v362 = vcvt.s32.f32 %v346
        %v363 = vcvt.s32.f32 %v347
        %v364 = vcvt.s32.f32 %v348
        %v365 = vcvt.s32.f32 %v349
        %v366 = vcvt.s32.f32 %v350
        %v367 = vcvt.s32.f32 %v351
        %v368 = vcvt.s32.f32 %v352
        %vm369 = vcmask 130048
        %370 = vst.msk [vmem:[%s311] sm:$0xff] %vm369, %v353
        %371 = vst.msk [vmem:[%s311 + $0x8] sm:$0xff] %vm369, %v354
        %372 = vst.msk [vmem:[%s311 + $0x10] sm:$0xff] %vm369, %v355
        %373 = vst.msk [vmem:[%s311 + $0x18] sm:$0xff] %vm369, %v356
        %374 = vst.msk [vmem:[%s311 + $0x20] sm:$0xff] %vm369, %v357
        %375 = vst.msk [vmem:[%s311 + $0x28] sm:$0xff] %vm369, %v358
        %376 = vst.msk [vmem:[%s311 + $0x30] sm:$0xff] %vm369, %v359
        %377 = vst.msk [vmem:[%s311 + $0x38] sm:$0xff] %vm369, %v360
        %378 = vst.msk [vmem:[%s311 + $0x40] sm:$0xff] %vm369, %v361
        %379 = vst.msk [vmem:[%s311 + $0x48] sm:$0xff] %vm369, %v362
        %380 = vst.msk [vmem:[%s311 + $0x50] sm:$0xff] %vm369, %v363
        %381 = vst.msk [vmem:[%s311 + $0x58] sm:$0xff] %vm369, %v364
        %382 = vst.msk [vmem:[%s311 + $0x60] sm:$0xff] %vm369, %v365
        %383 = vst.msk [vmem:[%s311 + $0x68] sm:$0xff] %vm369, %v366
        %384 = vst.msk [vmem:[%s311 + $0x70] sm:$0xff] %vm369, %v367
        %385 = vst.msk [vmem:[%s311 + $0x78] sm:$0xff] %vm369, %v368
        %v386 = vld [vmem:[%s281] sm:$0xff]
        %v387 = vld [vmem:[%s281 + $0x8] sm:$0xff]
        %388 = vrot.lane.b32.xlu0 %v386, 1
        %v389 = vpop.permute.xlu0 %388
        %390 = vrot.lane.b32.xlu0 %v387, 1
        %v391 = vpop.permute.xlu0 %390
        %vm392 = vcmp.ne.s32.totalorder %v386, %v389
        %vm393 = vcmp.ne.s32.totalorder %v387, %v391
        %v394 = vsel %vm392, 1, 0
        %v395 = vsel %vm393, 1, 0
        %v396 = vcvt.s32.f32 %v394
        %v397 = vcvt.s32.f32 %v395
        %vm398 = vcmask 1040384
        %v399 = vrot.slane %v386, 7
        %v400 = vrot.slane %v387, 7
        %v401 = vsel %vm398, %v399, %v400
        %vm402 = vcmp.ne.s32.totalorder %v386, %v399
        %vm403 = vcmp.ne.s32.totalorder %v387, %v401
        %v404 = vsel %vm402, 1, 0
        %v405 = vsel %vm403, 1, 0
        %v406 = vcvt.s32.f32 %v404
        %v407 = vcvt.s32.f32 %v405
        %vm408 = vcmask 7168
        %v409 = vsel %vm408, 0.0, %v396
        %v410 = vsel %vm408, 0.0, %v397
        %413 = vrot.lane.b32.xlu0 %v396, 127
        %v414 = vpop.permute.xlu0 %413
        %415 = vrot.lane.b32.xlu0 %v397, 127
        %v416 = vpop.permute.xlu0 %415
        %vm419 = vcmask 121856
        %v420 = vsel %vm419, %v414, 0.0
        %v421 = vsel %vm419, %v416, 0.0
        %v422 = vadd.f32 %v409, %v420
        %v423 = vadd.f32 %v410, %v421
        %v424 = vsel %vm398, 0.0, %v406
        %v425 = vadd.f32 %v422, %v424
        %v426 = vadd.f32 %v423, %v407
        %vm429 = vcmask 1046528
        %v430 = vrot.slane %v406, 1
        %v431 = vrot.slane %v407, 1
        %v432 = vsel %vm429, %v430, %v431
        %v435 = vsel %vm429, %v431, 0.0
        %v436 = vadd.f32 %v425, %v432
        %v437 = vadd.f32 %v426, %v435
        %vm438 = vcmp.gt.f32.partialorder %v436, 0.0
        %vm439 = vcmp.gt.f32.partialorder %v437, 0.0
        %v440 = vsel %vm438, 1, 0
        %v441 = vsel %vm439, 1, 0
        %v442 = vcvt.s32.f32 %v440
        %v443 = vcvt.s32.f32 %v441
        %s444 = scalar_lea.vmem %s311, 128 [#allocation11]
        %445 = vst.msk [vmem:[%s444] sm:$0xff] %vm369, %v442
        %446 = vst.msk [vmem:[%s444 + $0x8] sm:$0xff] %vm369, %v443
        %s447 = sld [smem:[#allocation2]]
        %v448 = vstv %s447
        %v449 = vmul.f32 %v353, %v448
        %v450 = vmul.f32 %v354, %v448
        %s451 = sld [smem:[#allocation2 + $0x1]]
        %v452 = vstv %s451
        %v453 = vmul.f32 %v355, %v452
        %v454 = vmul.f32 %v356, %v452
        %v455 = vadd.f32 %v449, %v453
        %v456 = vadd.f32 %v450, %v454
        %s457 = sld [smem:[#allocation2 + $0x2]]
        %v458 = vstv %s457
        %v459 = vmul.f32 %v357, %v458
        %v460 = vmul.f32 %v358, %v458
        %v461 = vadd.f32 %v455, %v459
        %v462 = vadd.f32 %v456, %v460
        %s463 = sld [smem:[#allocation2 + $0x3]]
        %v464 = vstv %s463
        %v465 = vmul.f32 %v359, %v464
        %v466 = vmul.f32 %v360, %v464
        %v467 = vadd.f32 %v461, %v465
        %v468 = vadd.f32 %v462, %v466
        %s469 = sld [smem:[#allocation2 + $0x4]]
        %v470 = vstv %s469
        %v471 = vmul.f32 %v361, %v470
        %v472 = vmul.f32 %v362, %v470
        %v473 = vadd.f32 %v467, %v471
        %v474 = vadd.f32 %v468, %v472
        %s475 = sld [smem:[#allocation2 + $0x5]]
        %v476 = vstv %s475
        %v477 = vmul.f32 %v363, %v476
        %v478 = vmul.f32 %v364, %v476
        %v479 = vadd.f32 %v473, %v477
        %v480 = vadd.f32 %v474, %v478
        %s481 = sld [smem:[#allocation2 + $0x6]]
        %v482 = vstv %s481
        %v483 = vmul.f32 %v365, %v482
        %v484 = vmul.f32 %v366, %v482
        %v485 = vadd.f32 %v479, %v483
        %v486 = vadd.f32 %v480, %v484
        %s487 = sld [smem:[#allocation2 + $0x7]]
        %v488 = vstv %s487
        %v489 = vmul.f32 %v367, %v488
        %v490 = vmul.f32 %v368, %v488
        %v491 = vadd.f32 %v485, %v489
        %v492 = vadd.f32 %v486, %v490
        %s493 = sld [smem:[#allocation2 + $0x8]]
        %v494 = vstv %s493
        %v495 = vmul.f32 %v442, %v494
        %v496 = vmul.f32 %v443, %v494
        %v497 = vadd.f32 %v491, %v495
        %v498 = vadd.f32 %v492, %v496
        %s499 = sld [smem:[#allocation7]]
        %v500 = vstv %s499
        %v501 = vadd.f32 %v497, %v500
        %v502 = vadd.f32 %v498, %v500
        %v503 = vtanh.pop %v501
        %v504 = vtanh.pop %v502
        %505 = vst.msk [vmem:[%s318] sm:$0xff] %vm369, %v503
        %506 = vst.msk [vmem:[%s318 + $0x8] sm:$0xff] %vm369, %v504
        %s507 = sld [smem:[#allocation2 + $0x80]]
        %v508 = vstv %s507
        %v509 = vmul.f32 %v353, %v508
        %v510 = vmul.f32 %v354, %v508
        %s511 = sld [smem:[#allocation2 + $0x81]]
        %v512 = vstv %s511
        %v513 = vmul.f32 %v355, %v512
        %v514 = vmul.f32 %v356, %v512
        %v515 = vadd.f32 %v509, %v513
        %v516 = vadd.f32 %v510, %v514
        %s517 = sld [smem:[#allocation2 + $0x82]]
        %v518 = vstv %s517
        %v519 = vmul.f32 %v357, %v518
        %v520 = vmul.f32 %v358, %v518
        %v521 = vadd.f32 %v515, %v519
        %v522 = vadd.f32 %v516, %v520
        %s523 = sld [smem:[#allocation2 + $0x83]]
        %v524 = vstv %s523
        %v525 = vmul.f32 %v359, %v524
        %v526 = vmul.f32 %v360, %v524
        %v527 = vadd.f32 %v521, %v525
        %v528 = vadd.f32 %v522, %v526
        %s529 = sld [smem:[#allocation2 + $0x84]]
        %v530 = vstv %s529
        %v531 = vmul.f32 %v361, %v530
        %v532 = vmul.f32 %v362, %v530
        %v533 = vadd.f32 %v527, %v531
        %v534 = vadd.f32 %v528, %v532
        %s535 = sld [smem:[#allocation2 + $0x85]]
        %v536 = vstv %s535
        %v537 = vmul.f32 %v363, %v536
        %v538 = vmul.f32 %v364, %v536
        %v539 = vadd.f32 %v533, %v537
        %v540 = vadd.f32 %v534, %v538
        %s541 = sld [smem:[#allocation2 + $0x86]]
        %v542 = vstv %s541
        %v543 = vmul.f32 %v365, %v542
        %v544 = vmul.f32 %v366, %v542
        %v545 = vadd.f32 %v539, %v543
        %v546 = vadd.f32 %v540, %v544
        %s547 = sld [smem:[#allocation2 + $0x87]]
        %v548 = vstv %s547
        %v549 = vmul.f32 %v367, %v548
        %v550 = vmul.f32 %v368, %v548
        %v551 = vadd.f32 %v545, %v549
        %v552 = vadd.f32 %v546, %v550
        %s553 = sld [smem:[#allocation2 + $0x88]]
        %v554 = vstv %s553
        %v555 = vmul.f32 %v442, %v554
        %v556 = vmul.f32 %v443, %v554
        %v557 = vadd.f32 %v551, %v555
        %v558 = vadd.f32 %v552, %v556
        %s559 = sld [smem:[#allocation7 + $0x1]]
        %v560 = vstv %s559
        %v561 = vadd.f32 %v557, %v560
        %v562 = vadd.f32 %v558, %v560
        %v563 = vtanh.pop %v561
        %v564 = vtanh.pop %v562
        %s565 = scalar_lea.vmem %s318, 16 [#allocation12]
        %566 = vst.msk [vmem:[%s565] sm:$0xff] %vm369, %v563
        %567 = vst.msk [vmem:[%s565 + $0x8] sm:$0xff] %vm369, %v564
        %s568 = sld [smem:[#allocation2 + $0x100]]
        %v569 = vstv %s568
        %v570 = vmul.f32 %v353, %v569
        %v571 = vmul.f32 %v354, %v569
        %s572 = sld [smem:[#allocation2 + $0x101]]
        %v573 = vstv %s572
        %v574 = vmul.f32 %v355, %v573
        %v575 = vmul.f32 %v356, %v573
        %v576 = vadd.f32 %v570, %v574
        %v577 = vadd.f32 %v571, %v575
        %s578 = sld [smem:[#allocation2 + $0x102]]
        %v579 = vstv %s578
        %v580 = vmul.f32 %v357, %v579
        %v581 = vmul.f32 %v358, %v579
        %v582 = vadd.f32 %v576, %v580
        %v583 = vadd.f32 %v577, %v581
        %s584 = sld [smem:[#allocation2 + $0x103]]
        %v585 = vstv %s584
        %v586 = vmul.f32 %v359, %v585
        %v587 = vmul.f32 %v360, %v585
        %v588 = vadd.f32 %v582, %v586
        %v589 = vadd.f32 %v583, %v587
        %s590 = sld [smem:[#allocation2 + $0x104]]
        %v591 = vstv %s590
        %v592 = vmul.f32 %v361, %v591
        %v593 = vmul.f32 %v362, %v591
        %v594 = vadd.f32 %v588, %v592
        %v595 = vadd.f32 %v589, %v593
        %s596 = sld [smem:[#allocation2 + $0x105]]
        %v597 = vstv %s596
        %v598 = vmul.f32 %v363, %v597
        %v599 = vmul.f32 %v364, %v597
        %v600 = vadd.f32 %v594, %v598
        %v601 = vadd.f32 %v595, %v599
        %s602 = sld [smem:[#allocation2 + $0x106]]
        %v603 = vstv %s602
        %v604 = vmul.f32 %v365, %v603
        %v605 = vmul.f32 %v366, %v603
        %v606 = vadd.f32 %v600, %v604
        %v607 = vadd.f32 %v601, %v605
        %s608 = sld [smem:[#allocation2 + $0x107]]
        %v609 = vstv %s608
        %v610 = vmul.f32 %v367, %v609
        %v611 = vmul.f32 %v368, %v609
        %v612 = vadd.f32 %v606, %v610
        %v613 = vadd.f32 %v607, %v611
        %s614 = sld [smem:[#allocation2 + $0x108]]
        %v615 = vstv %s614
        %v616 = vmul.f32 %v442, %v615
        %v617 = vmul.f32 %v443, %v615
        %v618 = vadd.f32 %v612, %v616
        %v619 = vadd.f32 %v613, %v617
        %s620 = sld [smem:[#allocation7 + $0x2]]
        %v621 = vstv %s620
        %v622 = vadd.f32 %v618, %v621
        %v623 = vadd.f32 %v619, %v621
        %v624 = vtanh.pop %v622
        %v625 = vtanh.pop %v623
        %s626 = scalar_lea.vmem %s318, 32 [#allocation12]
        %627 = vst.msk [vmem:[%s626] sm:$0xff] %vm369, %v624
        %628 = vst.msk [vmem:[%s626 + $0x8] sm:$0xff] %vm369, %v625
        %s629 = sand.u32 %s133, 1
        %s630 = scalar_lea.sflag [#allocation4], %s629
        %s631 = sand.u32 %s133, 1
        %s632 = smul.addr %s631, 144
        %s633 = scalar_lea.vmem [#allocation11], %s632
        %s634 = sand.u32 %s159, 1
        %s635 = scalar_lea.sflag [#allocation13], %s634
        %s636 = sand.u32 %s159, 1
        %s637 = smul.addr %s636, 48
        %s638 = scalar_lea.vmem [#allocation12], %s637
        // Predicated region
        $region53: #{tpu_custom_call.1} parent=35 // pred_check
          %p639 = pneg %p143
        $region54: #{tpu_custom_call.1} parent=35 // pred_check_branch
          %641 = sbr.rel (%p639) target = $region56
        $region55: #{tpu_custom_call.1} parent=35 // pred_region
          %s643 = ssub.s32 2304, 2304
          %644 = vsyncadd %s630, %s643
          %s645 = smul.addr %s31, 18
          %s646 = smul.addr %s645, 128
          %s647 = scalar_lea.hbm %s4, %s646
          %s648 = sshll.u32 %s633, 4
          %s649 = int_to_ptr.vmem [resolvable:$true] %s648
          %654 = dma.vmem_to_hbm [thread:$0]  %s649, 2304, %s647, %s630, 128, 128, 8
        $region56: #{tpu_custom_call.1} parent=35 // pred_fallthru
          _
        // Predicated region
        $region57: #{tpu_custom_call.1} parent=35 // pred_check
          %p655 = pneg %p169
        $region58: #{tpu_custom_call.1} parent=35 // pred_check_branch
          %657 = sbr.rel (%p655) target = $region60
        $region59: #{tpu_custom_call.1} parent=35 // pred_region
          %s659 = ssub.s32 768, 768
          %660 = vsyncadd %s635, %s659
          %s661 = smul.addr %s31, 6
          %s662 = smul.addr %s661, 128
          %s663 = scalar_lea.hbm %s5, %s662
          %s664 = sshll.u32 %s638, 4
          %s665 = int_to_ptr.vmem [resolvable:$true] %s664
          %670 = dma.vmem_to_hbm [thread:$0]  %s665, 768, %s663, %s635, 128, 128, 8
        $region60: #{tpu_custom_call.1} parent=35 // pred_fallthru
          _
      $region36: #{tpu_custom_call.1} parent=5 // pred_fallthru
        _
      %p671 = scmp.le.s32.totalorder 2, %s26
      // Predicated region
      $region61: #{tpu_custom_call.1} parent=5 // pred_check
        %p672 = pneg %p671
      $region62: #{tpu_custom_call.1} parent=5 // pred_check_branch
        %674 = sbr.rel (%p672) target = $region64
      $region63: #{tpu_custom_call.1} parent=5 // pred_region
        %s675 = ssub.s32 %s26, 2
        // Predicated region
        $region65: #{tpu_custom_call.1} parent=63 // pred_check
          %p676 = pneg %p149
        $region66: #{tpu_custom_call.1} parent=63 // pred_check_branch
          %678 = sbr.rel (%p676) target = $region68
        $region67: #{tpu_custom_call.1} parent=63 // pred_region
          %s679 = sand.u32 %s134, 1
          %s680 = scalar_lea.sflag [#allocation4], %s679
          %s681 = sand.u32 %s134, 1
          %s682 = smul.addr %s681, 144
          %s683 = scalar_lea.vmem [#allocation11], %s682
          %684 = dma.done %s680, 2304
        $region68: #{tpu_custom_call.1} parent=63 // pred_fallthru
          _
        // Predicated region
        $region69: #{tpu_custom_call.1} parent=63 // pred_check
          %p685 = pneg %p175
        $region70: #{tpu_custom_call.1} parent=63 // pred_check_branch
          %687 = sbr.rel (%p685) target = $region72
        $region71: #{tpu_custom_call.1} parent=63 // pred_region
          %s688 = sand.u32 %s160, 1
          %s689 = scalar_lea.sflag [#allocation13], %s688
          %s690 = sand.u32 %s160, 1
          %s691 = smul.addr %s690, 48
          %s692 = scalar_lea.vmem [#allocation12], %s691
          %693 = dma.done %s689, 768
        $region72: #{tpu_custom_call.1} parent=63 // pred_fallthru
          _
      $region64: #{tpu_custom_call.1} parent=5 // pred_fallthru
        _
    $region6: #{tpu_custom_call.1} parent=1 // loop_footer
      %s30 = sadd.s32 1, %s26
    $region7: #{tpu_custom_call.1} parent=1 // loop_footer_branch
      %25 = sbr.rel target = $region3
    $region8: #{tpu_custom_call.1} parent=1 // loop_exit
      _
    %694 = vsyncpa [#allocation3], 1
    %s695 = scalar_lea.sflag [#allocation3], 1
    %696 = vsyncpa %s695, 1
    %697 = vsyncpa [#allocation10], 1
    %s698 = scalar_lea.sflag [#allocation10], 1
    %699 = vsyncpa %s698, 1
    %700 = vsyncpa [#allocation4], 1
    %s701 = scalar_lea.sflag [#allocation4], 1
    %702 = vsyncpa %s701, 1
    %703 = vsyncpa [#allocation13], 1
    %s704 = scalar_lea.sflag [#allocation13], 1
    %705 = vsyncpa %s704, 1
    %706 = vsyncpa [#allocation5], 1
    %s707 = scalar_lea.sflag [#allocation5], 1
    %708 = vsyncpa %s707, 1
    %709 = vsyncpa [#allocation6], 1
    %s710 = scalar_lea.sflag [#allocation6], 1
    %711 = vsyncpa %s710, 1

</llo_original>
